<compile_context>
chip_gen: v5e
topology: v5e:2x2
jax: 0.10.0
libtpu: 0.0.40
codegen_flags: <defaults>
</compile_context>

<pallas_src>
import functools
import math

import jax
import jax.numpy as jnp
from jax.experimental import pallas as pl
from jax.experimental.pallas import tpu as pltpu


_EPS = 1e-6  # nn.LayerNorm(d_model, eps=1e-06) in the reference module


def _round_up(a, m):
    return ((a + m - 1) // m) * m


def _nbytes(shape, dt):
    return math.prod(shape) * jnp.dtype(dt).itemsize


def _vmem_usable_bytes():
    """Usable scoped-VMEM budget for this chip generation (leaves headroom)."""
    try:
        cap = int(pltpu.get_tpu_info().vmem_capacity_bytes)
    except Exception:
        cap = 64 << 20                       # conservative: v7x has 64 MiB / TC
    if cap < (64 << 20):
        cap = 64 << 20
    return cap - max(8 << 20, cap // 8)      # 64 MiB -> 56 MiB, 128 MiB -> 112 MiB


def _row_tile_candidates(upper):
    """Descending row-tile sizes (multiples of 8) starting at `upper`."""
    cands = []
    t = max(8, _round_up(upper, 8))
    while t > 8:
        cands.append(t)
        t = max(8, _round_up(t // 2, 8))
    cands.append(8)
    return cands


def _layer_norm_f32(x_f32, d_model, d_model_p):
    """LayerNorm (no affine; affine folded into W1/b1) over the last axis.

    Masked two-pass form: zero-padded lanes do not bias mean/var and there is
    no E[x^2]-E[x]^2 catastrophic cancellation.  Padded lanes of the result are
    garbage but only ever multiply zero-padded rows of W1 downstream.
    """
    inv_d = 1.0 / d_model
    mean = jnp.sum(x_f32, axis=-1, keepdims=True) * inv_d
    diff = x_f32 - mean
    if d_model_p > d_model:
        lane = jax.lax.broadcasted_iota(jnp.int32, x_f32.shape, x_f32.ndim - 1)
        diff_m = jnp.where(lane < d_model, diff, 0.0)
    else:
        diff_m = diff
    var = jnp.sum(diff_m * diff_m, axis=-1, keepdims=True) * inv_d
    return diff * jax.lax.rsqrt(var + _EPS)


# ---------------------------------------------------------------------------
# Path A: weights fully VMEM-resident, single "parallel" row grid axis.
# ---------------------------------------------------------------------------
def _ffn_resident_kernel(x_ref, w1_ref, b1_ref, w2_ref, b2_ref, o_ref, *,
                         d_model, d_model_p):
    xn = _layer_norm_f32(x_ref[...].astype(jnp.float32), d_model, d_model_p)
    h = jnp.dot(xn.astype(w1_ref.dtype), w1_ref[...],
                preferred_element_type=jnp.float32)
    h = jnp.maximum(h + b1_ref[...], 0.0)                 # ReLU; dropout_1 = identity (eval)
    y = jnp.dot(h.astype(w2_ref.dtype), w2_ref[...],
                preferred_element_type=jnp.float32)
    o_ref[...] = (y + b2_ref[...]).astype(o_ref.dtype)    # dropout_2 = identity (eval)


# ---------------------------------------------------------------------------
# Path B: d_ff chunked as a trailing "arbitrary" reduction axis (weights too
# large for VMEM residency).
# ---------------------------------------------------------------------------
def _ffn_chunked_kernel(x_ref, w1_ref, b1_ref, w2_ref, b2_ref, o_ref,
                        xn_ref, acc_ref, *, d_model, d_model_p):
    k = pl.program_id(1)

    @pl.when(k == 0)
    def _():
        xn = _layer_norm_f32(x_ref[...].astype(jnp.float32), d_model, d_model_p)
        xn_ref[...] = xn.astype(xn_ref.dtype)
        acc_ref[...] = jnp.zeros_like(acc_ref)

    h = jnp.dot(xn_ref[...], w1_ref[...], preferred_element_type=jnp.float32)
    h = jnp.maximum(h + b1_ref[...], 0.0)                 # dropout_1 = identity (eval)
    acc_ref[...] += jnp.dot(h.astype(w2_ref.dtype), w2_ref[...],
                            preferred_element_type=jnp.float32)

    @pl.when(k == pl.num_programs(1) - 1)
    def _():
        o_ref[...] = (acc_ref[...] + b2_ref[...]).astype(o_ref.dtype)


def feed_forward(x, gamma, beta, w1, b1, w2, b2, *,
                 tile_rows=None, tile_ff=None, stream_dtype=None):
    """FeedForward forward: W2(relu(W1(LN(x)) + b1)) + b2 (eval-mode dropout).

    x:      (batch, seq, d_model)
    w1:     (d_model, d_ff)  -- nn.Linear weight pre-transposed
    b1:     (1, d_ff)
    w2:     (d_ff, d_model)  -- pre-transposed
    b2:     (1, d_model)
    gamma, beta: (1, d_model) LayerNorm affine parameters
    stream_dtype: optional dtype (e.g. jnp.bfloat16) to stream x in; output
                  stays in x.dtype.
    """
    B, L, d_model = x.shape
    d_ff = w1.shape[1]
    n_rows = B * L

    compute_dtype = w1.dtype          # bf16 weights -> bf16 MXU operands, f32 acc

    # ---- fold LayerNorm affine into Linear1 (free precompute on static weights)
    w1_f32 = w1.astype(jnp.float32)
    w1_fold = (gamma.reshape(d_model, 1).astype(jnp.float32) * w1_f32).astype(compute_dtype)
    b1_fold = (b1.reshape(1, d_ff).astype(jnp.float32)
               + beta.reshape(1, d_model).astype(jnp.float32) @ w1_f32)

    # ---- padded lane dims (multiples of 128 -> lane-dense, unmasked stores)
    d_model_p = _round_up(d_model, 128)
    d_ff_p = _round_up(d_ff, 128)

    stream_dt = jnp.dtype(stream_dtype) if stream_dtype is not None else x.dtype
    out_dtype = x.dtype

    usable = _vmem_usable_bytes()
    headroom = 4 << 20

    # keep >= 2 row tiles when possible so both v7x TensorCores get work
    max_tr = max(8, _round_up(-(-n_rows // 2), 8))
    user_tr = None if tile_rows is None else max(8, _round_up(tile_rows, 8))

    def resident_budget(tr):
        return (4 * _nbytes((tr, d_model_p), stream_dt)                    # x/out, 2 bufs each
                + 2 * (_nbytes((d_model_p, d_ff_p), compute_dtype)
                       + _nbytes((d_ff_p, d_model_p), compute_dtype))      # W1,W2 (conservative 2x)
                + 2 * (_nbytes((1, d_ff_p), jnp.float32)
                       + _nbytes((1, d_model_p), jnp.float32))             # b1, b2
                + _nbytes((tr, d_ff_p), jnp.float32)                       # h intermediate
                + 2 * _nbytes((tr, d_model_p), jnp.float32)                # xn + f32 result
                + headroom)

    def chunked_budget(tr, tf):
        return (4 * _nbytes((tr, d_model_p), stream_dt)
                + 2 * (_nbytes((d_model_p, tf), compute_dtype)
                       + _nbytes((tf, d_model_p), compute_dtype))
                + 2 * (_nbytes((1, tf), jnp.float32)
                       + _nbytes((1, d_model_p), jnp.float32))
                + _nbytes((tr, d_model_p), compute_dtype)                  # xn scratch
                + _nbytes((tr, d_model_p), jnp.float32)                    # f32 accumulator
                + _nbytes((tr, tf), jnp.float32)                           # h intermediate
                + headroom)

    # ---- choose path / tiles -------------------------------------------------
    resident_tr = None
    if tile_ff is None:               # explicit tile_ff forces the chunked path
        upper = user_tr if user_tr is not None else min(512, max_tr)
        for tr in _row_tile_candidates(upper):
            if resident_budget(tr) <= usable:
                resident_tr = tr
                break

    x2d = x.reshape(n_rows, d_model).astype(stream_dt)

    if resident_tr is not None:
        # -------------------- Path A: weights resident, 1-D row grid ----------
        tr = resident_tr
        rows_p = _round_up(n_rows, tr)

        x_p = jnp.pad(x2d, ((0, rows_p - n_rows), (0, d_model_p - d_model)))
        w1_p = jnp.pad(w1_fold, ((0, d_model_p - d_model), (0, d_ff_p - d_ff)))
        b1_p = jnp.pad(b1_fold, ((0, 0), (0, d_ff_p - d_ff)))
        w2_p = jnp.pad(w2.astype(compute_dtype),
                       ((0, d_ff_p - d_ff), (0, d_model_p - d_model)))
        b2_p = jnp.pad(b2.reshape(1, d_model).astype(jnp.float32),
                       ((0, 0), (0, d_model_p - d_model)))

        kernel = functools.partial(_ffn_resident_kernel,
                                   d_model=d_model, d_model_p=d_model_p)
        out2d = pl.pallas_call(
            kernel,
            out_shape=jax.ShapeDtypeStruct((rows_p, d_model_p), out_dtype),
            grid_spec=pltpu.PrefetchScalarGridSpec(
                num_scalar_prefetch=0,
                grid=(rows_p // tr,),
                in_specs=[
                    pl.BlockSpec((tr, d_model_p), lambda i: (i, 0)),       # x rows (stream)
                    pl.BlockSpec((d_model_p, d_ff_p), lambda i: (0, 0)),   # W1 (resident)
                    pl.BlockSpec((1, d_ff_p), lambda i: (0, 0)),           # b1
                    pl.BlockSpec((d_ff_p, d_model_p), lambda i: (0, 0)),   # W2 (resident)
                    pl.BlockSpec((1, d_model_p), lambda i: (0, 0)),        # b2
                ],
                out_specs=pl.BlockSpec((tr, d_model_p), lambda i: (i, 0)),
            ),
            compiler_params=pltpu.CompilerParams(
                dimension_semantics=("parallel",),
                vmem_limit_bytes=int(min(max(resident_budget(tr), 32 << 20), usable)),
            ),
        )(x_p, w1_p, b1_p, w2_p, b2_p)

    else:
        # -------------------- Path B: chunked d_ff reduction ------------------
        if tile_ff is not None:
            tf_cands = [min(max(128, _round_up(tile_ff, 128)), d_ff_p)]
        else:
            tf_cands = [t for t in (1024, 512, 256, 128) if t <= d_ff_p] or [128]

        tr_upper = user_tr if user_tr is not None else min(1024, max_tr)
        chosen = None
        for tr in _row_tile_candidates(tr_upper):        # prioritise large row tiles
            for tf in tf_cands:                          # then the largest ff chunk
                if chunked_budget(tr, tf) <= usable:
                    chosen = (tr, tf)
                    break
            if chosen is not None:
                break
        if chosen is None:
            chosen = (8, tf_cands[-1])
        tr, tf = chosen

        rows_p = _round_up(n_rows, tr)
        d_ff_g = _round_up(d_ff_p, tf)

        x_p = jnp.pad(x2d, ((0, rows_p - n_rows), (0, d_model_p - d_model)))
        w1_p = jnp.pad(w1_fold, ((0, d_model_p - d_model), (0, d_ff_g - d_ff)))
        b1_p = jnp.pad(b1_fold, ((0, 0), (0, d_ff_g - d_ff)))
        w2_p = jnp.pad(w2.astype(compute_dtype),
                       ((0, d_ff_g - d_ff), (0, d_model_p - d_model)))
        b2_p = jnp.pad(b2.reshape(1, d_model).astype(jnp.float32),
                       ((0, 0), (0, d_model_p - d_model)))

        kernel = functools.partial(_ffn_chunked_kernel,
                                   d_model=d_model, d_model_p=d_model_p)
        out2d = pl.pallas_call(
            kernel,
            out_shape=jax.ShapeDtypeStruct((rows_p, d_model_p), out_dtype),
            grid_spec=pltpu.PrefetchScalarGridSpec(
                num_scalar_prefetch=0,
                grid=(rows_p // tr, d_ff_g // tf),
                in_specs=[
                    pl.BlockSpec((tr, d_model_p), lambda i, k: (i, 0)),    # x rows
                    pl.BlockSpec((d_model_p, tf), lambda i, k: (0, k)),    # W1 chunk
                    pl.BlockSpec((1, tf), lambda i, k: (0, k)),            # b1 chunk
                    pl.BlockSpec((tf, d_model_p), lambda i, k: (k, 0)),    # W2 chunk
                    pl.BlockSpec((1, d_model_p), lambda i, k: (0, 0)),     # b2
                ],
                out_specs=pl.BlockSpec((tr, d_model_p), lambda i, k: (i, 0)),
                scratch_shapes=[
                    pltpu.VMEM((tr, d_model_p), compute_dtype),            # xn (post-LN)
                    pltpu.VMEM((tr, d_model_p), jnp.float32),              # accumulator
                ],
            ),
            compiler_params=pltpu.CompilerParams(
                dimension_semantics=("parallel", "arbitrary"),
                vmem_limit_bytes=int(min(max(chunked_budget(tr, tf), 32 << 20), usable)),
            ),
        )(x_p, w1_p, b1_p, w2_p, b2_p)

    return out2d[:n_rows, :d_model].reshape(B, L, d_model)


def _reference(x, gamma, beta, w1, b1, w2, b2):
    xf = x.astype(jnp.float32)
    mean = jnp.mean(xf, axis=-1, keepdims=True)
    var = jnp.mean((xf - mean) ** 2, axis=-1, keepdims=True)
    xn = (xf - mean) / jnp.sqrt(var + _EPS) * gamma.reshape(-1) + beta.reshape(-1)
    h = jnp.maximum(xn @ w1 + b1.reshape(-1), 0.0)
    return (h @ w2 + b2.reshape(-1)).astype(x.dtype)


def _make_params(key, d_model, d_ff):
    kw1, kb1, kw2, kb2, kg, kbt = jax.random.split(key, 6)
    w1 = jax.random.normal(kw1, (d_model, d_ff), jnp.float32) / jnp.sqrt(d_model)
    b1 = jax.random.normal(kb1, (1, d_ff), jnp.float32) * 0.01
    w2 = jax.random.normal(kw2, (d_ff, d_model), jnp.float32) / jnp.sqrt(d_ff)
    b2 = jax.random.normal(kb2, (1, d_model), jnp.float32) * 0.01
    gamma = 1.0 + 0.1 * jax.random.normal(kg, (1, d_model), jnp.float32)
    beta = 0.05 * jax.random.normal(kbt, (1, d_model), jnp.float32)
    return gamma, beta, w1, b1, w2, b2


if __name__ == "__main__":
    key = jax.random.PRNGKey(0)
    k0, k1, k2, k3 = jax.random.split(key, 4)

    # ---- Test 1: weights-resident fast path (batch=2, seq=8, d_model=32, d_ff=64)
    B, L, d_model, d_ff = 2, 8, 32, 64
    x = jax.random.normal(k0, (B, L, d_model), dtype=jnp.float32)
    gamma, beta, w1, b1, w2, b2 = _make_params(k1, d_model, d_ff)

    out = jax.block_until_ready(feed_forward(x, gamma, beta, w1, b1, w2, b2))
    ref = _reference(x, gamma, beta, w1, b1, w2, b2)
    assert out.shape == (B, L, d_model)
    assert jnp.allclose(out, ref, atol=1e-4, rtol=1e-4), "resident-path mismatch"

    # ---- Test 2: force the chunked d_ff path (non-128-multiple dims, row padding)
    B2, L2, d_model2, d_ff2 = 2, 9, 48, 300
    x2 = jax.random.normal(k2, (B2, L2, d_model2), dtype=jnp.float32)
    gamma2, beta2, w1_2, b1_2, w2_2, b2_2 = _make_params(k3, d_model2, d_ff2)

    out2 = jax.block_until_ready(
        feed_forward(x2, gamma2, beta2, w1_2, b1_2, w2_2, b2_2, tile_ff=128))
    ref2 = _reference(x2, gamma2, beta2, w1_2, b1_2, w2_2, b2_2)
    assert out2.shape == (B2, L2, d_model2)
    assert jnp.allclose(out2, ref2, atol=1e-4, rtol=1e-4), "chunked-path mismatch"

    print("KERNEL_OK")
</pallas_src>

<mosaic_0001>
module attributes {stable_mosaic.version = 11 : i64} {
  func.func @_ffn_resident_kernel(%arg0: i32, %arg1: memref<8x128xf32, #tpu.memory_space<vmem>>, %arg2: memref<128x128xf32, #tpu.memory_space<vmem>>, %arg3: memref<1x128xf32, #tpu.memory_space<vmem>>, %arg4: memref<128x128xf32, #tpu.memory_space<vmem>>, %arg5: memref<1x128xf32, #tpu.memory_space<vmem>>, %arg6: memref<8x128xf32, #tpu.memory_space<vmem>>) attributes {dimension_semantics = [#tpu.dimension_semantics<parallel>], iteration_bounds = array<i64: 2>, scalar_prefetch = 0 : i64, scratch_operands = 0 : i64, tpu.core_type = #tpu.core_type<tc>, window_params = [{transform_indices = @transform_0, window_bounds = array<i64: 8, 128>}, {pipeline_mode = #tpu.pipeline_mode<synchronous>, transform_indices = @transform_1, window_bounds = array<i64: 128, 128>}, {pipeline_mode = #tpu.pipeline_mode<synchronous>, transform_indices = @transform_2, window_bounds = array<i64: 1, 128>}, {pipeline_mode = #tpu.pipeline_mode<synchronous>, transform_indices = @transform_3, window_bounds = array<i64: 128, 128>}, {pipeline_mode = #tpu.pipeline_mode<synchronous>, transform_indices = @transform_4, window_bounds = array<i64: 1, 128>}, {transform_indices = @transform_5, window_bounds = array<i64: 8, 128>}]} {
    %c0 = arith.constant 0 : index
    %c0_0 = arith.constant 0 : index
    %0 = vector.load %arg1[%c0, %c0_0] : memref<8x128xf32, #tpu.memory_space<vmem>>, vector<8x128xf32>
    %cst = arith.constant dense<0.000000e+00> : vector<8xf32>
    %1 = vector.multi_reduction <add>, %0, %cst [1] : vector<8x128xf32> to vector<8xf32>
    %2 = vector.shape_cast %1 : vector<8xf32> to vector<8x1xf32>
    %cst_1 = arith.constant 3.125000e-02 : f32
    %3 = vector.broadcast %cst_1 : f32 to vector<8x1xf32>
    %4 = arith.mulf %2, %3 : vector<8x1xf32>
    %5 = vector.broadcast %4 : vector<8x1xf32> to vector<8x128xf32>
    %6 = arith.subf %0, %5 : vector<8x128xf32>
    %7 = tpu.iota {dimensions = array<i32: 1>} : vector<8x128xi32>
    %c32_i32 = arith.constant 32 : i32
    %8 = vector.broadcast %c32_i32 : i32 to vector<8x128xi32>
    %9 = arith.cmpi slt, %7, %8 : vector<8x128xi32>
    %cst_2 = arith.constant 0.000000e+00 : f32
    %10 = vector.broadcast %cst_2 : f32 to vector<8x128xf32>
    %11 = arith.select %9, %6, %10 : vector<8x128xi1>, vector<8x128xf32>
    %12 = arith.mulf %11, %11 : vector<8x128xf32>
    %cst_3 = arith.constant dense<0.000000e+00> : vector<8xf32>
    %13 = vector.multi_reduction <add>, %12, %cst_3 [1] : vector<8x128xf32> to vector<8xf32>
    %14 = vector.shape_cast %13 : vector<8xf32> to vector<8x1xf32>
    %cst_4 = arith.constant 3.125000e-02 : f32
    %15 = vector.broadcast %cst_4 : f32 to vector<8x1xf32>
    %16 = arith.mulf %14, %15 : vector<8x1xf32>
    %cst_5 = arith.constant 9.99999997E-7 : f32
    %17 = vector.broadcast %cst_5 : f32 to vector<8x1xf32>
    %18 = arith.addf %16, %17 : vector<8x1xf32>
    %19 = math.rsqrt %18 : vector<8x1xf32>
    %20 = vector.broadcast %19 : vector<8x1xf32> to vector<8x128xf32>
    %21 = arith.mulf %6, %20 : vector<8x128xf32>
    %c0_6 = arith.constant 0 : index
    %c0_7 = arith.constant 0 : index
    %22 = vector.load %arg2[%c0_6, %c0_7] : memref<128x128xf32, #tpu.memory_space<vmem>>, vector<128x128xf32>
    %cst_8 = arith.constant dense<0.000000e+00> : vector<8x128xf32>
    %23 = tpu.matmul %21, %22, %cst_8 {dimension_numbers = #tpu.dot_dimension_numbers<[1], [0], [0], [1], [0, 0, 1, 1], [], []>} : vector<8x128xf32>, vector<128x128xf32>, vector<8x128xf32> -> vector<8x128xf32>
    %c0_9 = arith.constant 0 : index
    %c0_10 = arith.constant 0 : index
    %24 = vector.load %arg3[%c0_9, %c0_10] : memref<1x128xf32, #tpu.memory_space<vmem>>, vector<1x128xf32>
    %25 = vector.broadcast %24 : vector<1x128xf32> to vector<8x128xf32>
    %26 = arith.addf %23, %25 : vector<8x128xf32>
    %cst_11 = arith.constant 0.000000e+00 : f32
    %27 = vector.broadcast %cst_11 : f32 to vector<8x128xf32>
    %28 = arith.maximumf %26, %27 : vector<8x128xf32>
    %c0_12 = arith.constant 0 : index
    %c0_13 = arith.constant 0 : index
    %29 = vector.load %arg4[%c0_12, %c0_13] : memref<128x128xf32, #tpu.memory_space<vmem>>, vector<128x128xf32>
    %cst_14 = arith.constant dense<0.000000e+00> : vector<8x128xf32>
    %30 = tpu.matmul %28, %29, %cst_14 {dimension_numbers = #tpu.dot_dimension_numbers<[1], [0], [0], [1], [0, 0, 1, 1], [], []>} : vector<8x128xf32>, vector<128x128xf32>, vector<8x128xf32> -> vector<8x128xf32>
    %c0_15 = arith.constant 0 : index
    %c0_16 = arith.constant 0 : index
    %31 = vector.load %arg5[%c0_15, %c0_16] : memref<1x128xf32, #tpu.memory_space<vmem>>, vector<1x128xf32>
    %32 = vector.broadcast %31 : vector<1x128xf32> to vector<8x128xf32>
    %33 = arith.addf %30, %32 : vector<8x128xf32>
    %c0_17 = arith.constant 0 : index
    %c0_18 = arith.constant 0 : index
    %34 = vector.load %arg6[%c0_17, %c0_18] : memref<8x128xf32, #tpu.memory_space<vmem>>, vector<8x128xf32>
    tpu.vector_store %arg6[%c0_17, %c0_18], %33 {strides = array<i32>} : memref<8x128xf32, #tpu.memory_space<vmem>>, vector<8x128xf32>,
    return
  }
  func.func @transform_0(%arg0: i32) -> (i32, i32) {
    %c0_i32 = arith.constant 0 : i32
    %c0_i32_0 = arith.constant 0 : i32
    return %arg0, %c0_i32 : i32, i32
  }
  func.func @transform_1(%arg0: i32) -> (i32, i32) {
    %c0_i32 = arith.constant 0 : i32
    %c0_i32_0 = arith.constant 0 : i32
    %c0_i32_1 = arith.constant 0 : i32
    return %c0_i32, %c0_i32_0 : i32, i32
  }
  func.func @transform_2(%arg0: i32) -> (i32, i32) {
    %c0_i32 = arith.constant 0 : i32
    %c0_i32_0 = arith.constant 0 : i32
    %c0_i32_1 = arith.constant 0 : i32
    return %c0_i32, %c0_i32_0 : i32, i32
  }
  func.func @transform_3(%arg0: i32) -> (i32, i32) {
    %c0_i32 = arith.constant 0 : i32
    %c0_i32_0 = arith.constant 0 : i32
    %c0_i32_1 = arith.constant 0 : i32
    return %c0_i32, %c0_i32_0 : i32, i32
  }
  func.func @transform_4(%arg0: i32) -> (i32, i32) {
    %c0_i32 = arith.constant 0 : i32
    %c0_i32_0 = arith.constant 0 : i32
    %c0_i32_1 = arith.constant 0 : i32
    return %c0_i32, %c0_i32_0 : i32, i32
  }
  func.func @transform_5(%arg0: i32) -> (i32, i32) {
    %c0_i32 = arith.constant 0 : i32
    %c0_i32_0 = arith.constant 0 : i32
    return %arg0, %c0_i32 : i32, i32
  }
}

</mosaic_0001>

<llo_original>
// kernel: tpu_custom_call.1
$region0: #{tpu_custom_call.1}
  #allocation0 [shape = 'u32[]', space=smem, size = 0x4, offset = 0x4, fixed_abs, tag = 'smem constant byte address 0x4 - core index']
  #allocation1 [shape = 'u32[72,128]{1,0:T(1,128)}', space=vmem, size = 0x9000, scoped, tag = 'internal scratch']
  %s0 = inlined_call_operand.hbm [shape: f32[16,128], index: 0, kind: input, shape index: {}]
  %s1 = inlined_call_operand.hbm [shape: f32[128,128], index: 1, kind: input, shape index: {}]
  %s2 = inlined_call_operand.vmem [shape: f32[1,128], index: 2, kind: input, shape index: {}]
  %s3 = inlined_call_operand.hbm [shape: f32[128,128], index: 3, kind: input, shape index: {}]
  %s4 = inlined_call_operand.vmem [shape: f32[1,128], index: 4, kind: input, shape index: {}]
  %s5 = inlined_call_operand.hbm [shape: f32[16,128], index: 5, kind: output, shape index: {}]
  %s6 = sld [smem:[#allocation0]]
  $region65: #{tpu_custom_call.1} parent=0
    _
  %s8 = ssub.s32 1, %s6
  %s9 = scalar_select 0, %s8, %s6
  $region1: #{tpu_custom_call.1} parent=0
    #allocation2 [shape = 'u8[8192]{0}', space=vmem, size = 0x2000, scoped, tag = 'input window, operand 0']
    #allocation3 [shape = 's32[2]{0}', space=sflag, size = 0x8, scoped, tag = 'scoped memory for tpu_custom_call.1']
    #allocation4 [shape = 's32[2]{0}', space=sflag, size = 0x8, scoped, tag = 'scoped memory for tpu_custom_call.1']
    #allocation5 [shape = 'u8[65536]{0}', space=vmem, size = 0x10000, scoped, tag = 'input window, operand 1, single buffered']
    #allocation6 [shape = 's32[1]{0}', space=sflag, size = 0x4, scoped, tag = 'scoped memory for tpu_custom_call.1']
    #allocation7 [shape = 'u8[65536]{0}', space=vmem, size = 0x10000, scoped, tag = 'input window, operand 3, single buffered']
    #allocation8 [shape = 'u8[8192]{0}', space=vmem, size = 0x2000, scoped, tag = 'output window, operand 0']
    %10 = vsyncpa [#allocation3], 0
    %s11 = scalar_lea.sflag [#allocation3], 1
    %12 = vsyncpa %s11, 0
    %13 = vsyncpa [#allocation6], 0
    %14 = vsyncpa [#allocation4], 0
    %s15 = scalar_lea.sflag [#allocation4], 1
    %16 = vsyncpa %s15, 0
    loop: start=0, step=1, limit=4
    $region2: #{tpu_custom_call.1} parent=1 // loop_pre_header
      _
    $region3: #{tpu_custom_call.1} parent=1 // loop_header
      %s18 = sphi 0, %s22
      %p19 = scmp.ge.s32.totalorder %s18, 4
      %s28 = sphi 0, %s30
      %s31 = sphi 0, %s28
      %s32 = sphi 0, %s31
      %s48 = sphi 0, %s32
      %s52 = sphi 0, %s52
      %s54 = sphi 0, %s52
      %s55 = sphi 0, %s54
      %s69 = sphi 0, %s55
      %s73 = sphi 0, %s73
      %s75 = sphi 0, %s73
      %s76 = sphi 0, %s75
      %s90 = sphi 0, %s76
      %s94 = sphi 0, %s94
      %s96 = sphi 0, %s94
      %s97 = sphi 0, %s96
      %s111 = sphi 0, %s97
      %s115 = sphi 0, %s115
      %s117 = sphi 0, %s115
      %s118 = sphi 0, %s117
      %s132 = sphi 0, %s118
      %s138 = sphi 0, %s140
      %s141 = sphi 0, %s138
      %s142 = sphi 0, %s141
      %s158 = sphi 0, %s142
    $region4: #{tpu_custom_call.1} parent=1 // loop_header_branch
      %21 = sbr.rel (%p19) target = $region8
    $region5: #{tpu_custom_call.1} parent=1 // loop_body
      %s23 = ssub.s32 %s18, 1
      %s24 = ssub.s32 %s18, 2
      %s25 = sadd.s32 %s18, 1
      %s26 = ssub.s32 %s18, %s25
      %p27 = scmp.eq.s32.totalorder %s26, 0
      %s29 = sadd.s32 %s28, 1
      %s30 = scalar_select %p27, %s28, %s29
      %p33 = pneg %p27
      %p34 = scmp.eq.s32.totalorder %s18, 1
      %p35 = por %p33, %p34
      %p36 = scmp.ne.s32.totalorder %s28, %s31
      %p37 = scmp.eq.s32.totalorder %s18, 0
      %p38 = por %p36, %p37
      %p39 = scmp.ne.s32.totalorder %s28, %s31
      %p40 = scmp.eq.s32.totalorder %s23, 1
      %p41 = por %p39, %p40
      %p42 = scmp.ne.s32.totalorder %s31, %s32
      %p43 = scmp.eq.s32.totalorder %s23, 0
      %p44 = por %p42, %p43
      %p45 = scmp.ne.s32.totalorder %s31, %s32
      %p46 = scmp.eq.s32.totalorder %s24, 1
      %p47 = por %p45, %p46
      %p49 = scmp.ne.s32.totalorder %s32, %s48
      %p50 = scmp.eq.s32.totalorder %s24, 0
      %p51 = por %p49, %p50
      %s53 = sadd.s32 %s52, 1
      %p56 = scmp.eq.s32.totalorder %s18, 1
      %p57 = scmp.ne.s32.totalorder %s52, %s54
      %p58 = scmp.eq.s32.totalorder %s18, 0
      %p59 = por %p57, %p58
      %p60 = scmp.ne.s32.totalorder %s52, %s54
      %p61 = scmp.eq.s32.totalorder %s23, 1
      %p62 = por %p60, %p61
      %p63 = scmp.ne.s32.totalorder %s54, %s55
      %p64 = scmp.eq.s32.totalorder %s23, 0
      %p65 = por %p63, %p64
      %p66 = scmp.ne.s32.totalorder %s54, %s55
      %p67 = scmp.eq.s32.totalorder %s24, 1
      %p68 = por %p66, %p67
      %p70 = scmp.ne.s32.totalorder %s55, %s69
      %p71 = scmp.eq.s32.totalorder %s24, 0
      %p72 = por %p70, %p71
      %s74 = sadd.s32 %s73, 1
      %p77 = scmp.eq.s32.totalorder %s18, 1
      %p78 = scmp.ne.s32.totalorder %s73, %s75
      %p79 = scmp.eq.s32.totalorder %s18, 0
      %p80 = por %p78, %p79
      %p81 = scmp.ne.s32.totalorder %s73, %s75
      %p82 = scmp.eq.s32.totalorder %s23, 1
      %p83 = por %p81, %p82
      %p84 = scmp.ne.s32.totalorder %s75, %s76
      %p85 = scmp.eq.s32.totalorder %s23, 0
      %p86 = por %p84, %p85
      %p87 = scmp.ne.s32.totalorder %s75, %s76
      %p88 = scmp.eq.s32.totalorder %s24, 1
      %p89 = por %p87, %p88
      %p91 = scmp.ne.s32.totalorder %s76, %s90
      %p92 = scmp.eq.s32.totalorder %s24, 0
      %p93 = por %p91, %p92
      %s95 = sadd.s32 %s94, 1
      %p98 = scmp.eq.s32.totalorder %s18, 1
      %p99 = scmp.ne.s32.totalorder %s94, %s96
      %p100 = scmp.eq.s32.totalorder %s18, 0
      %p101 = por %p99, %p100
      %p102 = scmp.ne.s32.totalorder %s94, %s96
      %p103 = scmp.eq.s32.totalorder %s23, 1
      %p104 = por %p102, %p103
      %p105 = scmp.ne.s32.totalorder %s96, %s97
      %p106 = scmp.eq.s32.totalorder %s23, 0
      %p107 = por %p105, %p106
      %p108 = scmp.ne.s32.totalorder %s96, %s97
      %p109 = scmp.eq.s32.totalorder %s24, 1
      %p110 = por %p108, %p109
      %p112 = scmp.ne.s32.totalorder %s97, %s111
      %p113 = scmp.eq.s32.totalorder %s24, 0
      %p114 = por %p112, %p113
      %s116 = sadd.s32 %s115, 1
      %p119 = scmp.eq.s32.totalorder %s18, 1
      %p120 = scmp.ne.s32.totalorder %s115, %s117
      %p121 = scmp.eq.s32.totalorder %s18, 0
      %p122 = por %p120, %p121
      %p123 = scmp.ne.s32.totalorder %s115, %s117
      %p124 = scmp.eq.s32.totalorder %s23, 1
      %p125 = por %p123, %p124
      %p126 = scmp.ne.s32.totalorder %s117, %s118
      %p127 = scmp.eq.s32.totalorder %s23, 0
      %p128 = por %p126, %p127
      %p129 = scmp.ne.s32.totalorder %s117, %s118
      %p130 = scmp.eq.s32.totalorder %s24, 1
      %p131 = por %p129, %p130
      %p133 = scmp.ne.s32.totalorder %s118, %s132
      %p134 = scmp.eq.s32.totalorder %s24, 0
      %p135 = por %p133, %p134
      %s136 = ssub.s32 %s18, %s25
      %p137 = scmp.eq.s32.totalorder %s136, 0
      %s139 = sadd.s32 %s138, 1
      %s140 = scalar_select %p137, %s138, %s139
      %p143 = pneg %p137
      %p144 = scmp.eq.s32.totalorder %s18, 1
      %p145 = por %p143, %p144
      %p146 = scmp.ne.s32.totalorder %s138, %s141
      %p147 = scmp.eq.s32.totalorder %s18, 0
      %p148 = por %p146, %p147
      %p149 = scmp.ne.s32.totalorder %s138, %s141
      %p150 = scmp.eq.s32.totalorder %s23, 1
      %p151 = por %p149, %p150
      %p152 = scmp.ne.s32.totalorder %s141, %s142
      %p153 = scmp.eq.s32.totalorder %s23, 0
      %p154 = por %p152, %p153
      %p155 = scmp.ne.s32.totalorder %s141, %s142
      %p156 = scmp.eq.s32.totalorder %s24, 1
      %p157 = por %p155, %p156
      %p159 = scmp.ne.s32.totalorder %s142, %s158
      %p160 = scmp.eq.s32.totalorder %s24, 0
      %p161 = por %p159, %p160
      %p162 = scmp.le.s32.totalorder 1, %s18
      %p163 = scmp.lt.s32.totalorder %s18, 3
      %p164 = pnand %p162, %p163
      %p165 = pneg %p164
      // Predicated region
      $region9: #{tpu_custom_call.1} parent=5 // pred_check
        _
      $region10: #{tpu_custom_call.1} parent=5 // pred_check_branch
        %167 = sbr.rel (%p164) target = $region12
      $region11: #{tpu_custom_call.1} parent=5 // pred_region
        %s168 = ssub.s32 %s18, 1
        // Predicated region
        $region13: #{tpu_custom_call.1} parent=11 // pred_check
          %p169 = pneg %p65
        $region14: #{tpu_custom_call.1} parent=11 // pred_check_branch
          %171 = sbr.rel (%p169) target = $region16
        $region15: #{tpu_custom_call.1} parent=11 // pred_region
          %173 = vsyncadd [#allocation6], 0
          %s174 = sshll.u32 %s1, 4
          %s175 = int_to_ptr.hbm [resolvable:$true] %s174
          %s176 = sshll.u32 [#allocation5], 4
          %s177 = int_to_ptr.vmem [resolvable:$true] %s176
          %182 = dma.hbm_to_vmem [thread:$0]  %s175, 2048, %s177, [#allocation6], 128, 128, 8
        $region16: #{tpu_custom_call.1} parent=11 // pred_fallthru
          _
        // Predicated region
        $region17: #{tpu_custom_call.1} parent=11 // pred_check
          %p183 = pneg %p86
        $region18: #{tpu_custom_call.1} parent=11 // pred_check_branch
          %185 = sbr.rel (%p183) target = $region20
        $region19: #{tpu_custom_call.1} parent=11 // pred_region
          _
        $region20: #{tpu_custom_call.1} parent=11 // pred_fallthru
          _
        // Predicated region
        $region21: #{tpu_custom_call.1} parent=11 // pred_check
          %p186 = pneg %p107
        $region22: #{tpu_custom_call.1} parent=11 // pred_check_branch
          %188 = sbr.rel (%p186) target = $region24
        $region23: #{tpu_custom_call.1} parent=11 // pred_region
          %190 = vsyncadd [#allocation6], 0
          %s191 = sshll.u32 %s3, 4
          %s192 = int_to_ptr.hbm [resolvable:$true] %s191
          %s193 = sshll.u32 [#allocation7], 4
          %s194 = int_to_ptr.vmem [resolvable:$true] %s193
          %199 = dma.hbm_to_vmem [thread:$0]  %s192, 2048, %s194, [#allocation6], 128, 128, 8
        $region24: #{tpu_custom_call.1} parent=11 // pred_fallthru
          _
        // Predicated region
        $region25: #{tpu_custom_call.1} parent=11 // pred_check
          %p200 = pneg %p128
        $region26: #{tpu_custom_call.1} parent=11 // pred_check_branch
          %202 = sbr.rel (%p200) target = $region28
        $region27: #{tpu_custom_call.1} parent=11 // pred_region
          _
        $region28: #{tpu_custom_call.1} parent=11 // pred_fallthru
          _
      $region12: #{tpu_custom_call.1} parent=5 // pred_fallthru
        _
      %p203 = scmp.lt.s32.totalorder %s18, 2
      // Predicated region
      $region29: #{tpu_custom_call.1} parent=5 // pred_check
        %p204 = pneg %p203
      $region30: #{tpu_custom_call.1} parent=5 // pred_check_branch
        %206 = sbr.rel (%p204) target = $region32
      $region31: #{tpu_custom_call.1} parent=5 // pred_region
        // Predicated region
        $region33: #{tpu_custom_call.1} parent=31 // pred_check
          %p207 = pneg %p38
        $region34: #{tpu_custom_call.1} parent=31 // pred_check_branch
          %209 = sbr.rel (%p207) target = $region36
        $region35: #{tpu_custom_call.1} parent=31 // pred_region
          %s210 = sand.u32 %s28, 1
          %s211 = scalar_lea.sflag [#allocation3], %s210
          %s212 = sand.u32 %s28, 1
          %s213 = smul.addr %s212, 8
          %s214 = scalar_lea.vmem [#allocation2], %s213
          %216 = vsyncadd %s211, 0
          %s217 = smul.addr %s18, 8
          %s218 = scalar_lea.hbm %s0, %s217
          %s220 = sshll.u32 %s218, 4
          %s221 = int_to_ptr.hbm [resolvable:$true] %s220
          %s222 = sshll.u32 %s214, 4
          %s223 = int_to_ptr.vmem [resolvable:$true] %s222
          %225 = dma.hbm_to_vmem [thread:$0]  %s221, 128, %s223, %s211
        $region36: #{tpu_custom_call.1} parent=31 // pred_fallthru
          _
      $region32: #{tpu_custom_call.1} parent=5 // pred_fallthru
        _
      %p226 = scmp.le.s32.totalorder 1, %s18
      %p227 = scmp.lt.s32.totalorder %s18, 3
      %p228 = pnand %p226, %p227
      %p229 = pneg %p228
      // Predicated region
      $region37: #{tpu_custom_call.1} parent=5 // pred_check
        _
      $region38: #{tpu_custom_call.1} parent=5 // pred_check_branch
        %231 = sbr.rel (%p228) target = $region40
      $region39: #{tpu_custom_call.1} parent=5 // pred_region
        %s232 = ssub.s32 %s18, 1
        %s233 = sand.u32 %s31, 1
        %s234 = scalar_lea.sflag [#allocation3], %s233
        %s235 = sand.u32 %s31, 1
        %s236 = smul.addr %s235, 8
        %s237 = scalar_lea.vmem [#allocation2], %s236
        // Predicated region
        $region41: #{tpu_custom_call.1} parent=39 // pred_check
          %p238 = pneg %p44
        $region42: #{tpu_custom_call.1} parent=39 // pred_check_branch
          %240 = sbr.rel (%p238) target = $region44
        $region43: #{tpu_custom_call.1} parent=39 // pred_region
          %242 = dma.done %s234, 128
        $region44: #{tpu_custom_call.1} parent=39 // pred_fallthru
          _
        // Predicated region
        $region45: #{tpu_custom_call.1} parent=39 // pred_check
          %p243 = pneg %p65
        $region46: #{tpu_custom_call.1} parent=39 // pred_check_branch
          %245 = sbr.rel (%p243) target = $region48
        $region47: #{tpu_custom_call.1} parent=39 // pred_region
          %247 = dma.done [#allocation6], 2048
        $region48: #{tpu_custom_call.1} parent=39 // pred_fallthru
          _
        // Predicated region
        $region49: #{tpu_custom_call.1} parent=39 // pred_check
          %p248 = pneg %p107
        $region50: #{tpu_custom_call.1} parent=39 // pred_check_branch
          %250 = sbr.rel (%p248) target = $region52
        $region51: #{tpu_custom_call.1} parent=39 // pred_region
          %252 = dma.done [#allocation6], 2048
        $region52: #{tpu_custom_call.1} parent=39 // pred_fallthru
          _
        %s253 = sand.u32 %s31, 1
        %s254 = scalar_lea.sflag [#allocation3], %s253
        %s255 = sand.u32 %s31, 1
        %s256 = smul.addr %s255, 8
        %s257 = scalar_lea.vmem [#allocation2], %s256
        %p258 = pneg %p44
        %p259 = pneg %p41
        %p260 = pneg %p65
        %p261 = pneg %p62
        %p262 = pneg %p86
        %p263 = pneg %p83
        %p264 = pneg %p107
        %p265 = pneg %p104
        %p266 = pneg %p128
        %p267 = pneg %p125
        %p268 = pneg %p154
        %p269 = pneg %p151
        %s270 = sand.u32 %s141, 1
        %s271 = scalar_lea.sflag [#allocation4], %s270
        %s272 = sand.u32 %s141, 1
        %s273 = smul.addr %s272, 8
        %s274 = scalar_lea.vmem [#allocation8], %s273
        %v275 = vld [vmem:[%s237] sm:$0xff]
        %276 = vadd.xlane.f32.xlu0 %v275
        %v277 = vpop.xlane.xlu0 %276
        %v278 = vmul.f32 %v277, 0.03125
        %v279 = vsub.f32 %v275, %v278
        %v280 = vlaneseq
        %v281 = vand.u32 %v280, 127
        %vm282 = vcmp.lt.s32.totalorder %v281, 32
        %v283 = vsel %vm282, %v279, 0.0
        %v284 = vmul.f32 %v283, %v283
        %285 = vadd.xlane.f32.xlu0 %v284
        %v286 = vpop.xlane.xlu0 %285
        %v287 = vmul.f32 %v286, 0.03125
        %v288 = vadd.f32 %v287, 1e-06
        %v289 = vrsqrt.pop %v288
        %v290 = vmul.f32 %v289, %v288
        %v291 = vmul.f32 %v290, %v289
        %v292 = vmul.f32 0.5, %v291
        %v293 = vsub.f32 1.5, %v292
        %v294 = vmul.f32 %v289, %v293
        %vm295 = vweird.f32 %v288
        %vm296 = vweird.f32 %v289
        %vm297 = vmor %vm295, %vm296
        %v298 = vsel %vm297, %v289, %v294
        %v299 = vmul.f32 %v279, %v298
        %v300 = vld [vmem:[#allocation5] sm:$0xff]
        %v301 = vld [vmem:[#allocation5 + $0x8] sm:$0xff]
        %v302 = vld [vmem:[#allocation5 + $0x10] sm:$0xff]
        %v303 = vld [vmem:[#allocation5 + $0x18] sm:$0xff]
        %v304 = vld [vmem:[#allocation5 + $0x20] sm:$0xff]
        %v305 = vld [vmem:[#allocation5 + $0x28] sm:$0xff]
        %v306 = vld [vmem:[#allocation5 + $0x30] sm:$0xff]
        %v307 = vld [vmem:[#allocation5 + $0x38] sm:$0xff]
        %v308 = vld [vmem:[#allocation5 + $0x40] sm:$0xff]
        %v309 = vld [vmem:[#allocation5 + $0x48] sm:$0xff]
        %v310 = vld [vmem:[#allocation5 + $0x50] sm:$0xff]
        %v311 = vld [vmem:[#allocation5 + $0x58] sm:$0xff]
        %v312 = vld [vmem:[#allocation5 + $0x60] sm:$0xff]
        %v313 = vld [vmem:[#allocation5 + $0x68] sm:$0xff]
        %v314 = vld [vmem:[#allocation5 + $0x70] sm:$0xff]
        %v315 = vld [vmem:[#allocation5 + $0x78] sm:$0xff]
        %v316 = vld [vmem:[%s2] sm:$0x1]
        %v318 = vperm.slane %v316, 0
        %320 = vmatpush.msra.mxu0 %v315
        %321 = vmatpush.msra.mxu0 %v314
        %322 = vmatpush.msra.mxu0 %v313
        %323 = vmatpush.msra.mxu0 %v312
        %324 = vmatpush.msra.mxu0 %v311
        %325 = vmatpush.msra.mxu0 %v310
        %326 = vmatpush.msra.mxu0 %v309
        %327 = vmatpush.msra.mxu0 %v308
        %328 = vmatpush.msra.mxu0 %v307
        %329 = vmatpush.msra.mxu0 %v306
        %330 = vmatpush.msra.mxu0 %v305
        %331 = vmatpush.msra.mxu0 %v304
        %332 = vmatpush.msra.mxu0 %v303
        %333 = vmatpush.msra.mxu0 %v302
        %334 = vmatpush.msra.mxu0 %v301
        %335 = vmatpush.msra.mxu0 %v300
        %336 = vmatmul.f32.gmra.mxu0 %v299
        %v337 = vpop.f32.mrf.mxu0
        %v338 = vadd.f32 %v318, %v337
        %339 = vdwg.mxu0
        %v340 = vmax.f32 %v338, 0.0
        %v341 = vld [vmem:[#allocation7] sm:$0xff]
        %v342 = vld [vmem:[#allocation7 + $0x8] sm:$0xff]
        %v343 = vld [vmem:[#allocation7 + $0x10] sm:$0xff]
        %v344 = vld [vmem:[#allocation7 + $0x18] sm:$0xff]
        %v345 = vld [vmem:[#allocation7 + $0x20] sm:$0xff]
        %v346 = vld [vmem:[#allocation7 + $0x28] sm:$0xff]
        %v347 = vld [vmem:[#allocation7 + $0x30] sm:$0xff]
        %v348 = vld [vmem:[#allocation7 + $0x38] sm:$0xff]
        %v349 = vld [vmem:[#allocation7 + $0x40] sm:$0xff]
        %v350 = vld [vmem:[#allocation7 + $0x48] sm:$0xff]
        %v351 = vld [vmem:[#allocation7 + $0x50] sm:$0xff]
        %v352 = vld [vmem:[#allocation7 + $0x58] sm:$0xff]
        %v353 = vld [vmem:[#allocation7 + $0x60] sm:$0xff]
        %v354 = vld [vmem:[#allocation7 + $0x68] sm:$0xff]
        %v355 = vld [vmem:[#allocation7 + $0x70] sm:$0xff]
        %v356 = vld [vmem:[#allocation7 + $0x78] sm:$0xff]
        %v357 = vld [vmem:[%s4] sm:$0x1]
        %v359 = vperm.slane %v357, 0
        %361 = vmatpush.msra.mxu0 %v356
        %362 = vmatpush.msra.mxu0 %v355
        %363 = vmatpush.msra.mxu0 %v354
        %364 = vmatpush.msra.mxu0 %v353
        %365 = vmatpush.msra.mxu0 %v352
        %366 = vmatpush.msra.mxu0 %v351
        %367 = vmatpush.msra.mxu0 %v350
        %368 = vmatpush.msra.mxu0 %v349
        %369 = vmatpush.msra.mxu0 %v348
        %370 = vmatpush.msra.mxu0 %v347
        %371 = vmatpush.msra.mxu0 %v346
        %372 = vmatpush.msra.mxu0 %v345
        %373 = vmatpush.msra.mxu0 %v344
        %374 = vmatpush.msra.mxu0 %v343
        %375 = vmatpush.msra.mxu0 %v342
        %376 = vmatpush.msra.mxu0 %v341
        %377 = vmatmul.f32.gmra.mxu0 %v340
        %v378 = vpop.f32.mrf.mxu0
        %v379 = vadd.f32 %v359, %v378
        %380 = vdwg.mxu0
        %381 = vst [vmem:[%s274] sm:$0xff] %v379
        %s382 = sand.u32 %s141, 1
        %s383 = scalar_lea.sflag [#allocation4], %s382
        %s384 = sand.u32 %s141, 1
        %s385 = smul.addr %s384, 8
        %s386 = scalar_lea.vmem [#allocation8], %s385
        // Predicated region
        $region53: #{tpu_custom_call.1} parent=39 // pred_check
          %p387 = pneg %p151
        $region54: #{tpu_custom_call.1} parent=39 // pred_check_branch
          %389 = sbr.rel (%p387) target = $region56
        $region55: #{tpu_custom_call.1} parent=39 // pred_region
          %391 = vsyncadd %s383, 0
          %s392 = smul.addr %s23, 8
          %s393 = scalar_lea.hbm %s5, %s392
          %s395 = sshll.u32 %s386, 4
          %s396 = int_to_ptr.vmem [resolvable:$true] %s395
          %s397 = sshll.u32 %s393, 4
          %s398 = int_to_ptr.hbm [resolvable:$true] %s397
          %400 = dma.vmem_to_hbm [thread:$0]  %s396, 128, %s398, %s383
        $region56: #{tpu_custom_call.1} parent=39 // pred_fallthru
          _
      $region40: #{tpu_custom_call.1} parent=5 // pred_fallthru
        _
      %p401 = scmp.le.s32.totalorder 2, %s18
      // Predicated region
      $region57: #{tpu_custom_call.1} parent=5 // pred_check
        %p402 = pneg %p401
      $region58: #{tpu_custom_call.1} parent=5 // pred_check_branch
        %404 = sbr.rel (%p402) target = $region60
      $region59: #{tpu_custom_call.1} parent=5 // pred_region
        %s405 = ssub.s32 %s18, 2
        // Predicated region
        $region61: #{tpu_custom_call.1} parent=59 // pred_check
          %p406 = pneg %p157
        $region62: #{tpu_custom_call.1} parent=59 // pred_check_branch
          %408 = sbr.rel (%p406) target = $region64
        $region63: #{tpu_custom_call.1} parent=59 // pred_region
          %s409 = sand.u32 %s142, 1
          %s410 = scalar_lea.sflag [#allocation4], %s409
          %s411 = sand.u32 %s142, 1
          %s412 = smul.addr %s411, 8
          %s413 = scalar_lea.vmem [#allocation8], %s412
          %415 = dma.done %s410, 128
        $region64: #{tpu_custom_call.1} parent=59 // pred_fallthru
          _
      $region60: #{tpu_custom_call.1} parent=5 // pred_fallthru
        _
    $region6: #{tpu_custom_call.1} parent=1 // loop_footer
      %s22 = sadd.s32 1, %s18
    $region7: #{tpu_custom_call.1} parent=1 // loop_footer_branch
      %17 = sbr.rel target = $region3
    $region8: #{tpu_custom_call.1} parent=1 // loop_exit
      _
    %416 = vsyncpa [#allocation3], 1
    %s417 = scalar_lea.sflag [#allocation3], 1
    %418 = vsyncpa %s417, 1
    %419 = vsyncpa [#allocation6], 1
    %420 = vsyncpa [#allocation4], 1
    %s421 = scalar_lea.sflag [#allocation4], 1
    %422 = vsyncpa %s421, 1

</llo_original>
